<compile_context>
chip_gen: v7x
topology: tpu7x:2x2x1
jax: 0.10.0
libtpu: 0.0.40
codegen_flags: <defaults>
</compile_context>

<pallas_src>
import jax
import jax.numpy as jnp
from jax.experimental import pallas as pl
from jax.experimental.pallas import tpu as pltpu


def _round_up(x, m):
    return ((x + m - 1) // m) * m


def critic_kernel(s_ref, a_ref, w1s_ref, w1a_ref, b1_ref,
                  w2_ref, b2_ref, w3_ref, b3_ref, o_ref):
    # fc1 on the concatenated input, without materializing the concat:
    #   [state | action] @ W1  ==  state @ W1[:S] + action @ W1[S:]
    h1 = jnp.dot(s_ref[...], w1s_ref[...], preferred_element_type=jnp.float32)
    h1 = h1 + jnp.dot(a_ref[...], w1a_ref[...], preferred_element_type=jnp.float32)
    h1 = jnp.maximum(h1 + b1_ref[...], 0.0)                       # relu(fc1)

    h2 = jnp.dot(h1, w2_ref[...], preferred_element_type=jnp.float32) + b2_ref[...]
    h2 = jnp.maximum(h2, 0.0)                                     # relu(fc2)

    o_ref[...] = (jnp.dot(h2, w3_ref[...], preferred_element_type=jnp.float32)
                  + b3_ref[...])                                  # fc3 (narrow, unpadded)


@jax.jit
def critic_forward(state, action, params):
    """state: (B, S), action: (B, A); returns (B, output_size) in f32."""
    w1, b1, w2, b2, w3, b3 = params
    state = state.astype(jnp.float32)
    action = action.astype(jnp.float32)

    B, S = state.shape
    A = action.shape[1]
    assert w1.shape[0] == S + A, "fc1 in_features must equal state_dim + action_dim"
    H1 = w1.shape[1]
    H2 = w2.shape[1]
    out_size = w3.shape[1]

    # --- split fc1 weight so the concat never materializes -------------------
    w1_s = w1[:S, :]
    w1_a = w1[S:, :]

    # --- pad hidden dims to lane multiples (exact: zero weights, zero bias) ---
    H1P = _round_up(H1, 128)
    H2P = _round_up(H2, 128)
    w1_s = jnp.pad(w1_s, ((0, 0), (0, H1P - H1)))
    w1_a = jnp.pad(w1_a, ((0, 0), (0, H1P - H1)))
    b1_p = jnp.pad(b1, ((0, 0), (0, H1P - H1)))
    w2_p = jnp.pad(w2, ((0, H1P - H1), (0, H2P - H2)))
    b2_p = jnp.pad(b2, ((0, 0), (0, H2P - H2)))
    w3_p = jnp.pad(w3, ((0, H2P - H2), (0, 0)))          # output dim left unpadded

    # --- batch tiling: big tiles to amortize grid-step overhead, but cap at
    #     ceil(B/2) so the grid has >=2 steps (v7x: both TensorCores busy) -----
    MAX_TB = 2048
    TB = max(8, min(MAX_TB, _round_up(pl.cdiv(B, 2), 8)))
    B_pad = _round_up(B, TB)
    if B_pad != B:
        state = jnp.pad(state, ((0, B_pad - B), (0, 0)))
        action = jnp.pad(action, ((0, B_pad - B), (0, 0)))
    grid = (B_pad // TB,)

    const = lambda i: (0, 0)                # weights/biases: fetched once, stay resident
    in_specs = [
        pl.BlockSpec((TB, S), lambda i: (i, 0)),      # state tile
        pl.BlockSpec((TB, A), lambda i: (i, 0)),      # action tile
        pl.BlockSpec((S, H1P), const),                # W1[:S]   (H1 padded)
        pl.BlockSpec((A, H1P), const),                # W1[S:]   (H1 padded)
        pl.BlockSpec((1, H1P), const),                # b1
        pl.BlockSpec((H1P, H2P), const),              # W2
        pl.BlockSpec((1, H2P), const),                # b2
        pl.BlockSpec((H2P, out_size), const),         # W3 (narrow output dim = full dim)
        pl.BlockSpec((1, out_size), const),           # b3
    ]
    out_specs = pl.BlockSpec((TB, out_size), lambda i: (i, 0))

    flops = 2 * B_pad * ((S + A) * H1P + H1P * H2P + H2P * out_size)
    bytes_accessed = 4 * (B_pad * (S + A + out_size)
                          + (S + A) * H1P + H1P
                          + H1P * H2P + H2P
                          + H2P * out_size + out_size)

    out = pl.pallas_call(
        critic_kernel,
        grid=grid,
        in_specs=in_specs,
        out_specs=out_specs,
        out_shape=jax.ShapeDtypeStruct((B_pad, out_size), jnp.float32),
        compiler_params=pltpu.CompilerParams(
            dimension_semantics=("parallel",)),       # v7x: shard batch over 2 TCs
        cost_estimate=pl.CostEstimate(
            flops=flops, bytes_accessed=bytes_accessed, transcendentals=0),
    )(state, action, w1_s, w1_a, b1_p, w2_p, b2_p, w3_p, b3)

    # Row-only slice (no feature padding anymore); no-op when B_pad == B.
    return out if B_pad == B else out[:B, :]


def init_critic_params(key, input_size, output_size):
    """Deterministic init mimicking nn.Linear's U(-1/sqrt(fan_in), 1/sqrt(fan_in))."""
    h1 = 16 * input_size
    h2 = 16 * output_size
    dims = [(input_size, h1), (h1, h2), (h2, output_size)]
    params = []
    keys = jax.random.split(key, 2 * len(dims))
    for i, (fan_in, fan_out) in enumerate(dims):
        bound = 1.0 / jnp.sqrt(jnp.float32(fan_in))
        w = jax.random.uniform(keys[2 * i], (fan_in, fan_out),
                               minval=-bound, maxval=bound, dtype=jnp.float32)
        # bias kept 2-D (1, fan_out) so it broadcasts cleanly over the batch in-kernel
        b = jax.random.uniform(keys[2 * i + 1], (1, fan_out),
                               minval=-bound, maxval=bound, dtype=jnp.float32)
        params += [w, b]
    return tuple(params)


if __name__ == "__main__":
    # Small shapes consistent with a DDPG critic: state_dim=8, action_dim=4
    # -> input_size = 12, output_size = 4, batch = 8.
    state_dim, action_dim, output_size, batch = 8, 4, 4, 8
    input_size = state_dim + action_dim

    key = jax.random.PRNGKey(0)
    k_state, k_action, k_params = jax.random.split(key, 3)

    state = jax.random.normal(k_state, (batch, state_dim), dtype=jnp.float32)
    action = jax.random.normal(k_action, (batch, action_dim), dtype=jnp.float32)
    params = init_critic_params(k_params, input_size, output_size)

    out = critic_forward(state, action, params)
    jax.block_until_ready(out)

    # Pure-JAX reference check (same math, same params).
    w1, b1, w2, b2, w3, b3 = params
    x = jnp.concatenate([state, action], axis=1)
    ref = jnp.maximum(x @ w1 + b1, 0.0)
    ref = jnp.maximum(ref @ w2 + b2, 0.0)
    ref = ref @ w3 + b3
    assert out.shape == (batch, output_size)
    assert jnp.allclose(out, ref, atol=1e-4, rtol=1e-4)

    print("KERNEL_OK")
</pallas_src>

<mosaic_0001>
module attributes {stable_mosaic.version = 11 : i64} {
  func.func @critic_kernel(%arg0: i32, %arg1: memref<8x8xf32, #tpu.memory_space<vmem>>, %arg2: memref<8x4xf32, #tpu.memory_space<vmem>>, %arg3: memref<8x256xf32, #tpu.memory_space<vmem>>, %arg4: memref<4x256xf32, #tpu.memory_space<vmem>>, %arg5: memref<1x256xf32, #tpu.memory_space<vmem>>, %arg6: memref<256x128xf32, #tpu.memory_space<vmem>>, %arg7: memref<1x128xf32, #tpu.memory_space<vmem>>, %arg8: memref<128x4xf32, #tpu.memory_space<vmem>>, %arg9: memref<1x4xf32, #tpu.memory_space<vmem>>, %arg10: memref<8x4xf32, #tpu.memory_space<vmem>>) attributes {dimension_semantics = [#tpu.dimension_semantics<parallel>], iteration_bounds = array<i64: 1>, scalar_prefetch = 0 : i64, scratch_operands = 0 : i64, tpu.core_type = #tpu.core_type<tc>, window_params = [{transform_indices = @transform_0, window_bounds = array<i64: 8, 8>}, {transform_indices = @transform_1, window_bounds = array<i64: 8, 4>}, {pipeline_mode = #tpu.pipeline_mode<synchronous>, transform_indices = @transform_2, window_bounds = array<i64: 8, 256>}, {pipeline_mode = #tpu.pipeline_mode<synchronous>, transform_indices = @transform_3, window_bounds = array<i64: 4, 256>}, {pipeline_mode = #tpu.pipeline_mode<synchronous>, transform_indices = @transform_4, window_bounds = array<i64: 1, 256>}, {pipeline_mode = #tpu.pipeline_mode<synchronous>, transform_indices = @transform_5, window_bounds = array<i64: 256, 128>}, {pipeline_mode = #tpu.pipeline_mode<synchronous>, transform_indices = @transform_6, window_bounds = array<i64: 1, 128>}, {pipeline_mode = #tpu.pipeline_mode<synchronous>, transform_indices = @transform_7, window_bounds = array<i64: 128, 4>}, {pipeline_mode = #tpu.pipeline_mode<synchronous>, transform_indices = @transform_8, window_bounds = array<i64: 1, 4>}, {transform_indices = @transform_9, window_bounds = array<i64: 8, 4>}]} {
    %c0 = arith.constant 0 : index
    %c0_0 = arith.constant 0 : index
    %0 = vector.load %arg1[%c0, %c0_0] : memref<8x8xf32, #tpu.memory_space<vmem>>, vector<8x8xf32>
    %c0_1 = arith.constant 0 : index
    %c0_2 = arith.constant 0 : index
    %1 = vector.load %arg3[%c0_1, %c0_2] : memref<8x256xf32, #tpu.memory_space<vmem>>, vector<8x256xf32>
    %cst = arith.constant dense<0.000000e+00> : vector<8x256xf32>
    %2 = tpu.matmul %0, %1, %cst {dimension_numbers = #tpu.dot_dimension_numbers<[1], [0], [0], [1], [0, 0, 1, 1], [], []>} : vector<8x8xf32>, vector<8x256xf32>, vector<8x256xf32> -> vector<8x256xf32>
    %c0_3 = arith.constant 0 : index
    %c0_4 = arith.constant 0 : index
    %3 = vector.load %arg2[%c0_3, %c0_4] : memref<8x4xf32, #tpu.memory_space<vmem>>, vector<8x4xf32>
    %c0_5 = arith.constant 0 : index
    %c0_6 = arith.constant 0 : index
    %4 = vector.load %arg4[%c0_5, %c0_6] : memref<4x256xf32, #tpu.memory_space<vmem>>, vector<4x256xf32>
    %cst_7 = arith.constant dense<0.000000e+00> : vector<8x256xf32>
    %5 = tpu.matmul %3, %4, %cst_7 {dimension_numbers = #tpu.dot_dimension_numbers<[1], [0], [0], [1], [0, 0, 1, 1], [], []>} : vector<8x4xf32>, vector<4x256xf32>, vector<8x256xf32> -> vector<8x256xf32>
    %6 = arith.addf %2, %5 : vector<8x256xf32>
    %c0_8 = arith.constant 0 : index
    %c0_9 = arith.constant 0 : index
    %7 = vector.load %arg5[%c0_8, %c0_9] : memref<1x256xf32, #tpu.memory_space<vmem>>, vector<1x256xf32>
    %8 = vector.broadcast %7 : vector<1x256xf32> to vector<8x256xf32>
    %9 = arith.addf %6, %8 : vector<8x256xf32>
    %cst_10 = arith.constant 0.000000e+00 : f32
    %10 = vector.broadcast %cst_10 : f32 to vector<8x256xf32>
    %11 = arith.maximumf %9, %10 : vector<8x256xf32>
    %c0_11 = arith.constant 0 : index
    %c0_12 = arith.constant 0 : index
    %12 = vector.load %arg6[%c0_11, %c0_12] : memref<256x128xf32, #tpu.memory_space<vmem>>, vector<256x128xf32>
    %cst_13 = arith.constant dense<0.000000e+00> : vector<8x128xf32>
    %13 = tpu.matmul %11, %12, %cst_13 {dimension_numbers = #tpu.dot_dimension_numbers<[1], [0], [0], [1], [0, 0, 1, 1], [], []>} : vector<8x256xf32>, vector<256x128xf32>, vector<8x128xf32> -> vector<8x128xf32>
    %c0_14 = arith.constant 0 : index
    %c0_15 = arith.constant 0 : index
    %14 = vector.load %arg7[%c0_14, %c0_15] : memref<1x128xf32, #tpu.memory_space<vmem>>, vector<1x128xf32>
    %15 = vector.broadcast %14 : vector<1x128xf32> to vector<8x128xf32>
    %16 = arith.addf %13, %15 : vector<8x128xf32>
    %cst_16 = arith.constant 0.000000e+00 : f32
    %17 = vector.broadcast %cst_16 : f32 to vector<8x128xf32>
    %18 = arith.maximumf %16, %17 : vector<8x128xf32>
    %c0_17 = arith.constant 0 : index
    %c0_18 = arith.constant 0 : index
    %19 = vector.load %arg8[%c0_17, %c0_18] : memref<128x4xf32, #tpu.memory_space<vmem>>, vector<128x4xf32>
    %cst_19 = arith.constant dense<0.000000e+00> : vector<8x4xf32>
    %20 = tpu.matmul %18, %19, %cst_19 {dimension_numbers = #tpu.dot_dimension_numbers<[1], [0], [0], [1], [0, 0, 1, 1], [], []>} : vector<8x128xf32>, vector<128x4xf32>, vector<8x4xf32> -> vector<8x4xf32>
    %c0_20 = arith.constant 0 : index
    %c0_21 = arith.constant 0 : index
    %21 = vector.load %arg9[%c0_20, %c0_21] : memref<1x4xf32, #tpu.memory_space<vmem>>, vector<1x4xf32>
    %22 = vector.broadcast %21 : vector<1x4xf32> to vector<8x4xf32>
    %23 = arith.addf %20, %22 : vector<8x4xf32>
    %c0_22 = arith.constant 0 : index
    %c0_23 = arith.constant 0 : index
    %24 = vector.load %arg10[%c0_22, %c0_23] : memref<8x4xf32, #tpu.memory_space<vmem>>, vector<8x4xf32>
    tpu.vector_store %arg10[%c0_22, %c0_23], %23 {strides = array<i32>} : memref<8x4xf32, #tpu.memory_space<vmem>>, vector<8x4xf32>,
    return
  }
  func.func @transform_0(%arg0: i32) -> (i32, i32) {
    %c0_i32 = arith.constant 0 : i32
    %c0_i32_0 = arith.constant 0 : i32
    return %arg0, %c0_i32 : i32, i32
  }
  func.func @transform_1(%arg0: i32) -> (i32, i32) {
    %c0_i32 = arith.constant 0 : i32
    %c0_i32_0 = arith.constant 0 : i32
    return %arg0, %c0_i32 : i32, i32
  }
  func.func @transform_2(%arg0: i32) -> (i32, i32) {
    %c0_i32 = arith.constant 0 : i32
    %c0_i32_0 = arith.constant 0 : i32
    %c0_i32_1 = arith.constant 0 : i32
    return %c0_i32, %c0_i32_0 : i32, i32
  }
  func.func @transform_3(%arg0: i32) -> (i32, i32) {
    %c0_i32 = arith.constant 0 : i32
    %c0_i32_0 = arith.constant 0 : i32
    %c0_i32_1 = arith.constant 0 : i32
    return %c0_i32, %c0_i32_0 : i32, i32
  }
  func.func @transform_4(%arg0: i32) -> (i32, i32) {
    %c0_i32 = arith.constant 0 : i32
    %c0_i32_0 = arith.constant 0 : i32
    %c0_i32_1 = arith.constant 0 : i32
    return %c0_i32, %c0_i32_0 : i32, i32
  }
  func.func @transform_5(%arg0: i32) -> (i32, i32) {
    %c0_i32 = arith.constant 0 : i32
    %c0_i32_0 = arith.constant 0 : i32
    %c0_i32_1 = arith.constant 0 : i32
    return %c0_i32, %c0_i32_0 : i32, i32
  }
  func.func @transform_6(%arg0: i32) -> (i32, i32) {
    %c0_i32 = arith.constant 0 : i32
    %c0_i32_0 = arith.constant 0 : i32
    %c0_i32_1 = arith.constant 0 : i32
    return %c0_i32, %c0_i32_0 : i32, i32
  }
  func.func @transform_7(%arg0: i32) -> (i32, i32) {
    %c0_i32 = arith.constant 0 : i32
    %c0_i32_0 = arith.constant 0 : i32
    %c0_i32_1 = arith.constant 0 : i32
    return %c0_i32, %c0_i32_0 : i32, i32
  }
  func.func @transform_8(%arg0: i32) -> (i32, i32) {
    %c0_i32 = arith.constant 0 : i32
    %c0_i32_0 = arith.constant 0 : i32
    %c0_i32_1 = arith.constant 0 : i32
    return %c0_i32, %c0_i32_0 : i32, i32
  }
  func.func @transform_9(%arg0: i32) -> (i32, i32) {
    %c0_i32 = arith.constant 0 : i32
    %c0_i32_0 = arith.constant 0 : i32
    return %arg0, %c0_i32 : i32, i32
  }
}

</mosaic_0001>

<llo_original>
// kernel: critic_forward.1
$region0: #{critic_forward.1}
  #allocation0 [shape = 'u32[]', space=smem, size = 0x4, offset = 0x4, fixed_abs, tag = 'smem constant byte address 0x4 - core index']
  #allocation1 [shape = 'u32[144,128]{1,0:T(1,128)}', space=vmem, size = 0x12000, scoped, tag = 'internal scratch']
  %s0 = inlined_call_operand.vmem [shape: f32[8,8], index: 0, kind: input, shape index: {}]
  %s1 = inlined_call_operand.vmem [shape: f32[8,4], index: 1, kind: input, shape index: {}]
  %s2 = inlined_call_operand.vmem [shape: f32[8,256], index: 2, kind: input, shape index: {}]
  %s3 = inlined_call_operand.vmem [shape: f32[4,256], index: 3, kind: input, shape index: {}]
  %s4 = inlined_call_operand.vmem [shape: f32[1,256], index: 4, kind: input, shape index: {}]
  %s5 = inlined_call_operand.vmem [shape: f32[256,128], index: 5, kind: input, shape index: {}]
  %s6 = inlined_call_operand.vmem [shape: f32[1,128], index: 6, kind: input, shape index: {}]
  %s7 = inlined_call_operand.vmem [shape: f32[128,4], index: 7, kind: input, shape index: {}]
  %s8 = inlined_call_operand.vmem [shape: f32[1,4], index: 8, kind: input, shape index: {}]
  %s9 = inlined_call_operand.vmem [shape: f32[8,4], index: 9, kind: output, shape index: {}]
  %s10 = sld [smem:[#allocation0]]
  $region46: #{critic_forward.1} parent=0
    _
  %s12 = ssub.s32 1, %s10
  %s13 = scalar_select 0, %s12, %s10
  // Predicated region
  $region2: #{critic_forward.1} parent=0 // pred_check
    _
  $region3: #{critic_forward.1} parent=0 // pred_check_branch
    %15 = sbr.rel (0) target = $region5
  $region4: #{critic_forward.1} parent=0 // pred_region
    _
  $region5: #{critic_forward.1} parent=0 // pred_fallthru
    _
  // Predicated region
  $region6: #{critic_forward.1} parent=0 // pred_check
    _
  $region7: #{critic_forward.1} parent=0 // pred_check_branch
    %17 = sbr.rel (0) target = $region9
  $region8: #{critic_forward.1} parent=0 // pred_region
    _
  $region9: #{critic_forward.1} parent=0 // pred_fallthru
    _
  // Predicated region
  $region10: #{critic_forward.1} parent=0 // pred_check
    _
  $region11: #{critic_forward.1} parent=0 // pred_check_branch
    %19 = sbr.rel (0) target = $region13
  $region12: #{critic_forward.1} parent=0 // pred_region
    _
  $region13: #{critic_forward.1} parent=0 // pred_fallthru
    _
  // Predicated region
  $region14: #{critic_forward.1} parent=0 // pred_check
    _
  $region15: #{critic_forward.1} parent=0 // pred_check_branch
    %21 = sbr.rel (0) target = $region17
  $region16: #{critic_forward.1} parent=0 // pred_region
    _
  $region17: #{critic_forward.1} parent=0 // pred_fallthru
    _
  // Predicated region
  $region18: #{critic_forward.1} parent=0 // pred_check
    _
  $region19: #{critic_forward.1} parent=0 // pred_check_branch
    %23 = sbr.rel (0) target = $region21
  $region20: #{critic_forward.1} parent=0 // pred_region
    _
  $region21: #{critic_forward.1} parent=0 // pred_fallthru
    _
  // Predicated region
  $region22: #{critic_forward.1} parent=0 // pred_check
    _
  $region23: #{critic_forward.1} parent=0 // pred_check_branch
    %25 = sbr.rel (0) target = $region25
  $region24: #{critic_forward.1} parent=0 // pred_region
    _
  $region25: #{critic_forward.1} parent=0 // pred_fallthru
    _
  // Predicated region
  $region26: #{critic_forward.1} parent=0 // pred_check
    _
  $region27: #{critic_forward.1} parent=0 // pred_check_branch
    %27 = sbr.rel (0) target = $region29
  $region28: #{critic_forward.1} parent=0 // pred_region
    _
  $region29: #{critic_forward.1} parent=0 // pred_fallthru
    _
  // Predicated region
  $region30: #{critic_forward.1} parent=0 // pred_check
    _
  $region31: #{critic_forward.1} parent=0 // pred_check_branch
    %29 = sbr.rel (0) target = $region33
  $region32: #{critic_forward.1} parent=0 // pred_region
    _
  $region33: #{critic_forward.1} parent=0 // pred_fallthru
    _
  // Predicated region
  $region34: #{critic_forward.1} parent=0 // pred_check
    _
  $region35: #{critic_forward.1} parent=0 // pred_check_branch
    %31 = sbr.rel (0) target = $region37
  $region36: #{critic_forward.1} parent=0 // pred_region
    _
  $region37: #{critic_forward.1} parent=0 // pred_fallthru
    _
  %v32 = vld [vmem:[%s0] sm:$0xff]
  %v33 = vld [vmem:[%s2] sm:$0xff]
  %v34 = vld [vmem:[%s2 + $0x8] sm:$0xff]
  %v35 = vld [vmem:[%s1] sm:$0xff]
  %v36 = vld [vmem:[%s3] sm:$0xff]
  %v38 = vcombine.high %v36, %v36
  %vm39 = vcmask 31744
  %v41 = vsel %vm39, %v35, 0
  %vm43 = vcmask 1043456
  %v44 = vsel %vm43, %v36, 0
  %v46 = vsel %vm43, %v38, 0
  %48 = vmatprep.subr.mxu0 %v46
  %49 = vmatpush1.msra.mxu0 %v44
  %50 = vmatprep.subr.mxu0 0.0
  %51 = vmatpush1.msra.mxu0 0.0
  %52 = vmatprep.subr.mxu0 0.0
  %53 = vmatpush1.msra.mxu0 0.0
  %54 = vmatprep.subr.mxu0 0.0
  %55 = vmatpush1.msra.mxu0 0.0
  %56 = vmatprep.subr.mxu0 0.0
  %57 = vmatpush1.msra.mxu0 0.0
  %58 = vmatprep.subr.mxu0 0.0
  %59 = vmatpush1.msra.mxu0 0.0
  %60 = vmatprep.subr.mxu0 0.0
  %61 = vmatpush1.msra.mxu0 0.0
  %62 = vmatprep.subr.mxu0 0.0
  %63 = vmatpush1.msra.mxu0 0.0
  %64 = vmatprep.subr.mxu0 0.0
  %65 = vmatpush1.msra.mxu0 0.0
  %66 = vmatprep.subr.mxu0 0.0
  %67 = vmatpush1.msra.mxu0 0.0
  %68 = vmatprep.subr.mxu0 0.0
  %69 = vmatpush1.msra.mxu0 0.0
  %70 = vmatprep.subr.mxu0 0.0
  %71 = vmatpush1.msra.mxu0 0.0
  %72 = vmatprep.subr.mxu0 0.0
  %73 = vmatpush1.msra.mxu0 0.0
  %74 = vmatprep.subr.mxu0 0.0
  %75 = vmatpush1.msra.mxu0 0.0
  %76 = vmatprep.subr.mxu0 0.0
  %77 = vmatpush1.msra.mxu0 0.0
  %78 = vmatprep.subr.mxu0 0.0
  %79 = vmatpush1.msra.mxu0 0.0
  %80 = vmatprep.subr.mxu0 0.0
  %81 = vmatpush1.msra.mxu0 0.0
  %82 = vmatprep.subr.mxu0 0.0
  %83 = vmatpush1.msra.mxu0 0.0
  %84 = vmatprep.subr.mxu0 0.0
  %85 = vmatpush1.msra.mxu0 0.0
  %86 = vmatprep.subr.mxu0 0.0
  %87 = vmatpush1.msra.mxu0 0.0
  %88 = vmatprep.subr.mxu0 0.0
  %89 = vmatpush1.msra.mxu0 0.0
  %90 = vmatprep.subr.mxu0 0.0
  %91 = vmatpush1.msra.mxu0 0.0
  %92 = vmatprep.subr.mxu0 0.0
  %93 = vmatpush1.msra.mxu0 0.0
  %94 = vmatprep.subr.mxu0 0.0
  %95 = vmatpush1.msra.mxu0 0.0
  %96 = vmatprep.subr.mxu0 0.0
  %97 = vmatpush1.msra.mxu0 0.0
  %98 = vmatprep.subr.mxu0 0.0
  %99 = vmatpush1.msra.mxu0 0.0
  %100 = vmatprep.subr.mxu0 0.0
  %101 = vmatpush1.msra.mxu0 0.0
  %102 = vmatprep.subr.mxu0 0.0
  %103 = vmatpush1.msra.mxu0 0.0
  %104 = vmatprep.subr.mxu0 0.0
  %105 = vmatpush1.msra.mxu0 0.0
  %106 = vmatprep.subr.mxu0 0.0
  %107 = vmatpush1.msra.mxu0 0.0
  %108 = vmatprep.subr.mxu0 0.0
  %109 = vmatpush1.msra.mxu0 0.0
  %110 = vmatprep.subr.mxu0 0.0
  %111 = vmatpush1.msra.mxu0 0.0
  %112 = vmatprep.mubr.f32.mxu0 0.0
  %113 = vmatmul.mubr.f32.gmra.mrb[0].mxu0 %v41
  %v114 = vpop.f32.mrb[0].mxu0
  %v115 = vadd.f32 0.0, %v114
  %v116 = vpop.f32.mrb[0].mxu0
  %v117 = vadd.f32 0.0, %v116
  %118 = vdwg.mxu0
  %vm119 = vcmask 64512
  %v121 = vsel %vm119, %v32, 0
  %123 = vmatprep.subr.mxu0 %v34
  %124 = vmatpush1.msra.mxu0 %v33
  %125 = vmatprep.subr.mxu0 0.0
  %126 = vmatpush1.msra.mxu0 0.0
  %127 = vmatprep.subr.mxu0 0.0
  %128 = vmatpush1.msra.mxu0 0.0
  %129 = vmatprep.subr.mxu0 0.0
  %130 = vmatpush1.msra.mxu0 0.0
  %131 = vmatprep.subr.mxu0 0.0
  %132 = vmatpush1.msra.mxu0 0.0
  %133 = vmatprep.subr.mxu0 0.0
  %134 = vmatpush1.msra.mxu0 0.0
  %135 = vmatprep.subr.mxu0 0.0
  %136 = vmatpush1.msra.mxu0 0.0
  %137 = vmatprep.subr.mxu0 0.0
  %138 = vmatpush1.msra.mxu0 0.0
  %139 = vmatprep.subr.mxu0 0.0
  %140 = vmatpush1.msra.mxu0 0.0
  %141 = vmatprep.subr.mxu0 0.0
  %142 = vmatpush1.msra.mxu0 0.0
  %143 = vmatprep.subr.mxu0 0.0
  %144 = vmatpush1.msra.mxu0 0.0
  %145 = vmatprep.subr.mxu0 0.0
  %146 = vmatpush1.msra.mxu0 0.0
  %147 = vmatprep.subr.mxu0 0.0
  %148 = vmatpush1.msra.mxu0 0.0
  %149 = vmatprep.subr.mxu0 0.0
  %150 = vmatpush1.msra.mxu0 0.0
  %151 = vmatprep.subr.mxu0 0.0
  %152 = vmatpush1.msra.mxu0 0.0
  %153 = vmatprep.subr.mxu0 0.0
  %154 = vmatpush1.msra.mxu0 0.0
  %155 = vmatprep.subr.mxu0 0.0
  %156 = vmatpush1.msra.mxu0 0.0
  %157 = vmatprep.subr.mxu0 0.0
  %158 = vmatpush1.msra.mxu0 0.0
  %159 = vmatprep.subr.mxu0 0.0
  %160 = vmatpush1.msra.mxu0 0.0
  %161 = vmatprep.subr.mxu0 0.0
  %162 = vmatpush1.msra.mxu0 0.0
  %163 = vmatprep.subr.mxu0 0.0
  %164 = vmatpush1.msra.mxu0 0.0
  %165 = vmatprep.subr.mxu0 0.0
  %166 = vmatpush1.msra.mxu0 0.0
  %167 = vmatprep.subr.mxu0 0.0
  %168 = vmatpush1.msra.mxu0 0.0
  %169 = vmatprep.subr.mxu0 0.0
  %170 = vmatpush1.msra.mxu0 0.0
  %171 = vmatprep.subr.mxu0 0.0
  %172 = vmatpush1.msra.mxu0 0.0
  %173 = vmatprep.subr.mxu0 0.0
  %174 = vmatpush1.msra.mxu0 0.0
  %175 = vmatprep.subr.mxu0 0.0
  %176 = vmatpush1.msra.mxu0 0.0
  %177 = vmatprep.subr.mxu0 0.0
  %178 = vmatpush1.msra.mxu0 0.0
  %179 = vmatprep.subr.mxu0 0.0
  %180 = vmatpush1.msra.mxu0 0.0
  %181 = vmatprep.subr.mxu0 0.0
  %182 = vmatpush1.msra.mxu0 0.0
  %183 = vmatprep.subr.mxu0 0.0
  %184 = vmatpush1.msra.mxu0 0.0
  %185 = vmatprep.subr.mxu0 0.0
  %186 = vmatpush1.msra.mxu0 0.0
  %187 = vmatprep.mubr.f32.mxu0 0.0
  %188 = vmatmul.mubr.f32.gmra.mrb[0].mxu0 %v121
  %v189 = vpop.f32.mrb[0].mxu0
  %v190 = vadd.f32 %v115, %v189
  %v191 = vpop.f32.mrb[0].mxu0
  %v192 = vadd.f32 %v117, %v191
  %193 = vdwg.mxu0
  %v194 = vld [vmem:[%s4] sm:$0x3]
  %v196 = vlaneseq
  %v197 = vshrl.u32 %v196, 7
  %v198 = vsub.s32 0, %v197
  %v199 = vrot.slane %v194, %v198
  %v200 = vlaneseq
  %v201 = vshrl.u32 %v200, 7
  %v202 = vsub.s32 1, %v201
  %v203 = vrot.slane %v194, %v202
  %v206 = vadd.f32 %v190, %v199
  %v207 = vadd.f32 %v192, %v203
  %v208 = vmax.f32 %v206, 0.0
  %v209 = vmax.f32 %v207, 0.0
  %v210 = vld [vmem:[%s5] sm:$0xff]
  %v211 = vld [vmem:[%s5 + $0x8] sm:$0xff]
  %v212 = vld [vmem:[%s5 + $0x10] sm:$0xff]
  %v213 = vld [vmem:[%s5 + $0x18] sm:$0xff]
  %v214 = vld [vmem:[%s5 + $0x20] sm:$0xff]
  %v215 = vld [vmem:[%s5 + $0x28] sm:$0xff]
  %v216 = vld [vmem:[%s5 + $0x30] sm:$0xff]
  %v217 = vld [vmem:[%s5 + $0x38] sm:$0xff]
  %v218 = vld [vmem:[%s5 + $0x40] sm:$0xff]
  %v219 = vld [vmem:[%s5 + $0x48] sm:$0xff]
  %v220 = vld [vmem:[%s5 + $0x50] sm:$0xff]
  %v221 = vld [vmem:[%s5 + $0x58] sm:$0xff]
  %v222 = vld [vmem:[%s5 + $0x60] sm:$0xff]
  %v223 = vld [vmem:[%s5 + $0x68] sm:$0xff]
  %v224 = vld [vmem:[%s5 + $0x70] sm:$0xff]
  %v225 = vld [vmem:[%s5 + $0x78] sm:$0xff]
  %v226 = vld [vmem:[%s5 + $0x80] sm:$0xff]
  %v227 = vld [vmem:[%s5 + $0x88] sm:$0xff]
  %v228 = vld [vmem:[%s5 + $0x90] sm:$0xff]
  %v229 = vld [vmem:[%s5 + $0x98] sm:$0xff]
  %v230 = vld [vmem:[%s5 + $0xa0] sm:$0xff]
  %v231 = vld [vmem:[%s5 + $0xa8] sm:$0xff]
  %v232 = vld [vmem:[%s5 + $0xb0] sm:$0xff]
  %v233 = vld [vmem:[%s5 + $0xb8] sm:$0xff]
  %v234 = vld [vmem:[%s5 + $0xc0] sm:$0xff]
  %v235 = vld [vmem:[%s5 + $0xc8] sm:$0xff]
  %v236 = vld [vmem:[%s5 + $0xd0] sm:$0xff]
  %v237 = vld [vmem:[%s5 + $0xd8] sm:$0xff]
  %v238 = vld [vmem:[%s5 + $0xe0] sm:$0xff]
  %v239 = vld [vmem:[%s5 + $0xe8] sm:$0xff]
  %v240 = vld [vmem:[%s5 + $0xf0] sm:$0xff]
  %v241 = vld [vmem:[%s5 + $0xf8] sm:$0xff]
  %v242 = vld [vmem:[%s6] sm:$0x1]
  %v244 = vlaneseq
  %v245 = vshrl.u32 %v244, 7
  %v246 = vsub.s32 0, %v245
  %v247 = vrot.slane %v242, %v246
  %249 = vmatprep.subr.mxu0 0.0
  %250 = vmatpush1.msra.mxu0 %v210
  %251 = vmatprep.subr.mxu0 0.0
  %252 = vmatpush1.msra.mxu0 %v211
  %253 = vmatprep.subr.mxu0 0.0
  %254 = vmatpush1.msra.mxu0 %v212
  %255 = vmatprep.subr.mxu0 0.0
  %256 = vmatpush1.msra.mxu0 %v213
  %257 = vmatprep.subr.mxu0 0.0
  %258 = vmatpush1.msra.mxu0 %v214
  %259 = vmatprep.subr.mxu0 0.0
  %260 = vmatpush1.msra.mxu0 %v215
  %261 = vmatprep.subr.mxu0 0.0
  %262 = vmatpush1.msra.mxu0 %v216
  %263 = vmatprep.subr.mxu0 0.0
  %264 = vmatpush1.msra.mxu0 %v217
  %265 = vmatprep.subr.mxu0 0.0
  %266 = vmatpush1.msra.mxu0 %v218
  %267 = vmatprep.subr.mxu0 0.0
  %268 = vmatpush1.msra.mxu0 %v219
  %269 = vmatprep.subr.mxu0 0.0
  %270 = vmatpush1.msra.mxu0 %v220
  %271 = vmatprep.subr.mxu0 0.0
  %272 = vmatpush1.msra.mxu0 %v221
  %273 = vmatprep.subr.mxu0 0.0
  %274 = vmatpush1.msra.mxu0 %v222
  %275 = vmatprep.subr.mxu0 0.0
  %276 = vmatpush1.msra.mxu0 %v223
  %277 = vmatprep.subr.mxu0 0.0
  %278 = vmatpush1.msra.mxu0 %v224
  %279 = vmatprep.subr.mxu0 0.0
  %280 = vmatpush1.msra.mxu0 %v225
  %281 = vmatprep.subr.mxu0 0.0
  %282 = vmatpush1.msra.mxu0 %v226
  %283 = vmatprep.subr.mxu0 0.0
  %284 = vmatpush1.msra.mxu0 %v227
  %285 = vmatprep.subr.mxu0 0.0
  %286 = vmatpush1.msra.mxu0 %v228
  %287 = vmatprep.subr.mxu0 0.0
  %288 = vmatpush1.msra.mxu0 %v229
  %289 = vmatprep.subr.mxu0 0.0
  %290 = vmatpush1.msra.mxu0 %v230
  %291 = vmatprep.subr.mxu0 0.0
  %292 = vmatpush1.msra.mxu0 %v231
  %293 = vmatprep.subr.mxu0 0.0
  %294 = vmatpush1.msra.mxu0 %v232
  %295 = vmatprep.subr.mxu0 0.0
  %296 = vmatpush1.msra.mxu0 %v233
  %297 = vmatprep.subr.mxu0 0.0
  %298 = vmatpush1.msra.mxu0 %v234
  %299 = vmatprep.subr.mxu0 0.0
  %300 = vmatpush1.msra.mxu0 %v235
  %301 = vmatprep.subr.mxu0 0.0
  %302 = vmatpush1.msra.mxu0 %v236
  %303 = vmatprep.subr.mxu0 0.0
  %304 = vmatpush1.msra.mxu0 %v237
  %305 = vmatprep.subr.mxu0 0.0
  %306 = vmatpush1.msra.mxu0 %v238
  %307 = vmatprep.subr.mxu0 0.0
  %308 = vmatpush1.msra.mxu0 %v239
  %309 = vmatprep.subr.mxu0 0.0
  %310 = vmatpush1.msra.mxu0 %v240
  %311 = vmatprep.subr.mxu0 0.0
  %312 = vmatpush1.msra.mxu0 %v241
  %313 = vmatprep.mubr.f32.mxu0 %v209
  %314 = vmatmul.mubr.f32.gmra.mrb[0].mxu0 %v208
  %v315 = vpop.f32.mrb[0].mxu0
  %v316 = vadd.f32 %v247, %v315
  %v317 = vpop.f32.mrb[0].mxu0
  %318 = vdwg.mxu0
  %v319 = vmax.f32 %v316, 0.0
  %v320 = vld [vmem:[%s7] sm:$0xff]
  %v321 = vld [vmem:[%s7 + $0x8] sm:$0xff]
  %v322 = vld [vmem:[%s7 + $0x10] sm:$0xff]
  %v323 = vld [vmem:[%s7 + $0x18] sm:$0xff]
  %v324 = vld [vmem:[%s7 + $0x20] sm:$0xff]
  %v325 = vld [vmem:[%s7 + $0x28] sm:$0xff]
  %v326 = vld [vmem:[%s7 + $0x30] sm:$0xff]
  %v327 = vld [vmem:[%s7 + $0x38] sm:$0xff]
  %v328 = vld [vmem:[%s7 + $0x40] sm:$0xff]
  %v329 = vld [vmem:[%s7 + $0x48] sm:$0xff]
  %v330 = vld [vmem:[%s7 + $0x50] sm:$0xff]
  %v331 = vld [vmem:[%s7 + $0x58] sm:$0xff]
  %v332 = vld [vmem:[%s7 + $0x60] sm:$0xff]
  %v333 = vld [vmem:[%s7 + $0x68] sm:$0xff]
  %v334 = vld [vmem:[%s7 + $0x70] sm:$0xff]
  %v335 = vld [vmem:[%s7 + $0x78] sm:$0xff]
  %v336 = vld [vmem:[%s8] sm:$0x1]
  %v338 = vlaneseq
  %v339 = vshrl.u32 %v338, 7
  %v340 = vsub.s32 0, %v339
  %v341 = vrot.slane %v336, %v340
  %343 = vmatprep.subr.mxu0 0.0
  %344 = vmatpush1.msra.mxu0 %v320
  %345 = vmatprep.subr.mxu0 0.0
  %346 = vmatpush1.msra.mxu0 %v321
  %347 = vmatprep.subr.mxu0 0.0
  %348 = vmatpush1.msra.mxu0 %v322
  %349 = vmatprep.subr.mxu0 0.0
  %350 = vmatpush1.msra.mxu0 %v323
  %351 = vmatprep.subr.mxu0 0.0
  %352 = vmatpush1.msra.mxu0 %v324
  %353 = vmatprep.subr.mxu0 0.0
  %354 = vmatpush1.msra.mxu0 %v325
  %355 = vmatprep.subr.mxu0 0.0
  %356 = vmatpush1.msra.mxu0 %v326
  %357 = vmatprep.subr.mxu0 0.0
  %358 = vmatpush1.msra.mxu0 %v327
  %359 = vmatprep.subr.mxu0 0.0
  %360 = vmatpush1.msra.mxu0 %v328
  %361 = vmatprep.subr.mxu0 0.0
  %362 = vmatpush1.msra.mxu0 %v329
  %363 = vmatprep.subr.mxu0 0.0
  %364 = vmatpush1.msra.mxu0 %v330
  %365 = vmatprep.subr.mxu0 0.0
  %366 = vmatpush1.msra.mxu0 %v331
  %367 = vmatprep.subr.mxu0 0.0
  %368 = vmatpush1.msra.mxu0 %v332
  %369 = vmatprep.subr.mxu0 0.0
  %370 = vmatpush1.msra.mxu0 %v333
  %371 = vmatprep.subr.mxu0 0.0
  %372 = vmatpush1.msra.mxu0 %v334
  %373 = vmatprep.subr.mxu0 0.0
  %374 = vmatpush1.msra.mxu0 %v335
  %375 = vmatprep.subr.mxu0 0.0
  %376 = vmatpush1.msra.mxu0 0.0
  %377 = vmatprep.subr.mxu0 0.0
  %378 = vmatpush1.msra.mxu0 0.0
  %379 = vmatprep.subr.mxu0 0.0
  %380 = vmatpush1.msra.mxu0 0.0
  %381 = vmatprep.subr.mxu0 0.0
  %382 = vmatpush1.msra.mxu0 0.0
  %383 = vmatprep.subr.mxu0 0.0
  %384 = vmatpush1.msra.mxu0 0.0
  %385 = vmatprep.subr.mxu0 0.0
  %386 = vmatpush1.msra.mxu0 0.0
  %387 = vmatprep.subr.mxu0 0.0
  %388 = vmatpush1.msra.mxu0 0.0
  %389 = vmatprep.subr.mxu0 0.0
  %390 = vmatpush1.msra.mxu0 0.0
  %391 = vmatprep.subr.mxu0 0.0
  %392 = vmatpush1.msra.mxu0 0.0
  %393 = vmatprep.subr.mxu0 0.0
  %394 = vmatpush1.msra.mxu0 0.0
  %395 = vmatprep.subr.mxu0 0.0
  %396 = vmatpush1.msra.mxu0 0.0
  %397 = vmatprep.subr.mxu0 0.0
  %398 = vmatpush1.msra.mxu0 0.0
  %399 = vmatprep.subr.mxu0 0.0
  %400 = vmatpush1.msra.mxu0 0.0
  %401 = vmatprep.subr.mxu0 0.0
  %402 = vmatpush1.msra.mxu0 0.0
  %403 = vmatprep.subr.mxu0 0.0
  %404 = vmatpush1.msra.mxu0 0.0
  %405 = vmatprep.subr.mxu0 0.0
  %406 = vmatpush1.msra.mxu0 0.0
  %407 = vmatprep.mubr.f32.mxu0 0.0
  %408 = vmatmul.mubr.f32.gmra.mrb[0].mxu0 %v319
  %v409 = vpop.f32.mrb[0].mxu0
  %v410 = vadd.f32 %v341, %v409
  %v411 = vpop.f32.mrb[0].mxu0
  %412 = vdwg.mxu0
  %413 = vst.msk [vmem:[%s9] sm:$0xff] %vm39, %v410
  // Predicated region
  $region38: #{critic_forward.1} parent=0 // pred_check
    _
  $region39: #{critic_forward.1} parent=0 // pred_check_branch
    %415 = sbr.rel (0) target = $region41
  $region40: #{critic_forward.1} parent=0 // pred_region
    _
  $region41: #{critic_forward.1} parent=0 // pred_fallthru
    _
  // Predicated region
  $region42: #{critic_forward.1} parent=0 // pred_check
    _
  $region43: #{critic_forward.1} parent=0 // pred_check_branch
    %417 = sbr.rel (0) target = $region45
  $region44: #{critic_forward.1} parent=0 // pred_region
    _
  $region45: #{critic_forward.1} parent=0 // pred_fallthru
    _

</llo_original>
